<compile_context>
chip_gen: v6e
topology: v6e:2x2x1
jax: 0.10.0
libtpu: 0.0.40
codegen_flags: <defaults>
</compile_context>

<pallas_src>
import math

import jax
import jax.numpy as jnp
from jax import lax
from jax.experimental import pallas as pl
from jax.experimental.pallas import tpu as pltpu


def _round_up(x, m):
    return ((x + m - 1) // m) * m


def _pick_tile(dim, candidates=(512, 256, 128)):
    for c in candidates:
        if dim % c == 0:
            return c
    return dim  # unreachable: dim is always a multiple of 128


def _pick_tm(batch):
    """Batch tile: one tile with minimal 8-row padding when possible."""
    b8 = _round_up(max(batch, 1), 8)
    if b8 <= 512:
        return b8
    best_tm, best_key = None, None
    for tm in (512, 448, 384, 320, 256, 192, 128):
        waste = _round_up(b8, tm) - b8
        key = (waste, -tm)
        if best_key is None or key < best_key:
            best_tm, best_key = tm, key
    return best_tm


# --------------------------------------------------------------------------
# Kernels
# --------------------------------------------------------------------------
def _make_single_tile_kernel(k_pad, n_pad, has_bias):
    """Whole (padded) weight is one tile: grid=(m_tiles,), no K reduction axis."""

    def kernel(*refs):
        if has_bias:
            x_ref, w_ref, b_ref, o_ref = refs
        else:
            x_ref, w_ref, o_ref = refs
            b_ref = None
        # strict lower-triangular mask (row > col), applied in-kernel (VPU work
        # hidden under the MXU; no masked weight copy materialized in HBM).
        row = lax.broadcasted_iota(jnp.int32, (k_pad, n_pad), 0)
        col = lax.broadcasted_iota(jnp.int32, (k_pad, n_pad), 1)
        w_tile = w_ref[...]
        w_masked = jnp.where(row > col, w_tile, jnp.zeros_like(w_tile))
        out = jnp.dot(x_ref[...], w_masked, preferred_element_type=jnp.float32)
        if has_bias:
            out = out + b_ref[...]
        o_ref[...] = out.astype(o_ref.dtype)

    return kernel


def _make_tiled_kernel(tk, tn, has_bias):
    """Flattened (m, pair) grid; pair p = (n_ids[p], k_ids[p]) non-zero tile."""

    def kernel(*refs):
        if has_bias:
            nids, kids, first_f, last_f, x_ref, w_ref, b_ref, o_ref, acc_ref = refs
        else:
            nids, kids, first_f, last_f, x_ref, w_ref, o_ref, acc_ref = refs
            b_ref = None

        p = pl.program_id(1)
        n_idx = nids[p]
        k_idx = kids[p]
        row0 = k_idx * tk          # first (global) weight row of this tile
        col0 = n_idx * tn          # first (global) weight col of this tile

        @pl.when(first_f[p] == 1)
        def _init():
            acc_ref[...] = jnp.zeros_like(acc_ref)

        # Tile entirely below the diagonal: unmasked MXU dot.
        @pl.when(row0 >= col0 + tn)
        def _full():
            acc_ref[...] += jnp.dot(
                x_ref[...], w_ref[...], preferred_element_type=jnp.float32
            )

        # Tile straddling the diagonal: mask in-kernel, then dot.
        @pl.when(jnp.logical_and(row0 < col0 + tn, row0 + (tk - 1) > col0))
        def _straddle():
            row = lax.broadcasted_iota(jnp.int32, (tk, tn), 0) + row0
            col = lax.broadcasted_iota(jnp.int32, (tk, tn), 1) + col0
            w_tile = w_ref[...]
            w_masked = jnp.where(row > col, w_tile, jnp.zeros_like(w_tile))
            acc_ref[...] += jnp.dot(
                x_ref[...], w_masked, preferred_element_type=jnp.float32
            )

        @pl.when(last_f[p] == 1)
        def _finalize():
            out = acc_ref[...]
            if has_bias:
                out = out + b_ref[...]
            o_ref[...] = out.astype(o_ref.dtype)

    return kernel


# --------------------------------------------------------------------------
# Wrapper
# --------------------------------------------------------------------------
def autoregressive_linear(x, weight, bias=None, *, compute_dtype=None):
    """Forward of AutoregressiveLinear: x @ tril(weight, -1) [+ bias].

    x: (..., in_size); weight: (in_size, out_size); bias: (out_size,) or None.
    compute_dtype: optional narrow MXU dtype (e.g. jnp.bfloat16); accumulation
    stays float32 and the output keeps x's dtype.
    """
    orig_shape = x.shape
    if x.ndim == 1:
        x = x[None, :]
    elif x.ndim > 2:
        x = x.reshape(-1, x.shape[-1])

    B, in_size = x.shape
    in_w, out_size = weight.shape
    assert in_w == in_size, "weight must be (in_size, out_size)"
    out_dtype = x.dtype
    cdtype = out_dtype if compute_dtype is None else compute_dtype
    has_bias = bias is not None

    # --- lane-dense padding (no-op when already aligned) ---------------------
    k_pad = _round_up(max(in_size, 128), 128)
    n_pad = _round_up(max(out_size, 128), 128)
    tm = _pick_tm(B)
    m_pad = _round_up(max(B, 1), tm)

    x_p = jnp.pad(x.astype(cdtype), ((0, m_pad - B), (0, k_pad - in_size)))
    w_p = jnp.pad(weight.astype(cdtype),
                  ((0, k_pad - in_size), (0, n_pad - out_size)))
    if has_bias:
        b_p = jnp.pad(bias.astype(jnp.float32),
                      (0, n_pad - out_size)).reshape(1, n_pad)

    if k_pad <= 512 and n_pad <= 512:
        # ---------------- single-tile fast path -----------------------------
        kernel = _make_single_tile_kernel(k_pad, n_pad, has_bias)
        in_specs = [
            pl.BlockSpec((tm, k_pad), lambda i: (i, 0)),
            pl.BlockSpec((k_pad, n_pad), lambda i: (0, 0)),
        ]
        operands = [x_p, w_p]
        if has_bias:
            in_specs.append(pl.BlockSpec((1, n_pad), lambda i: (0, 0)))
            operands.append(b_p)

        out_p = pl.pallas_call(
            kernel,
            out_shape=jax.ShapeDtypeStruct((m_pad, n_pad), out_dtype),
            grid_spec=pltpu.PrefetchScalarGridSpec(
                num_scalar_prefetch=0,
                grid=(m_pad // tm,),
                in_specs=in_specs,
                out_specs=pl.BlockSpec((tm, n_pad), lambda i: (i, 0)),
            ),
            compiler_params=pltpu.CompilerParams(
                dimension_semantics=("parallel",),
            ),
        )(*operands)
    else:
        # ---------------- general path: flattened non-zero (n, k) grid ------
        tk = _pick_tile(k_pad)
        tn = _pick_tile(n_pad)
        nk_tiles = k_pad // tk
        nn_tiles = n_pad // tn

        # Build the static list of (n, k) tile pairs that survive tril(-1);
        # zero tiles are never DMA'd and never cost a grid step.
        n_ids, k_ids, first_f, last_f = [], [], [], []
        for n in range(nn_tiles):
            col0 = n * tn
            ks = [
                k for k in range(nk_tiles)
                if k * tk < in_size and (min((k + 1) * tk, in_size) - 1) > col0
            ]
            if not ks:
                ks = [0]  # all-zero column block: visit once to write zeros/bias
            for idx, k in enumerate(ks):
                n_ids.append(n)
                k_ids.append(k)
                first_f.append(1 if idx == 0 else 0)
                last_f.append(1 if idx == len(ks) - 1 else 0)
        num_pairs = len(n_ids)
        n_ids = jnp.asarray(n_ids, dtype=jnp.int32)
        k_ids = jnp.asarray(k_ids, dtype=jnp.int32)
        first_f = jnp.asarray(first_f, dtype=jnp.int32)
        last_f = jnp.asarray(last_f, dtype=jnp.int32)

        kernel = _make_tiled_kernel(tk, tn, has_bias)
        in_specs = [
            pl.BlockSpec((tm, tk),
                         lambda i, p, nids, kids, ff, lf: (i, kids[p])),
            pl.BlockSpec((tk, tn),
                         lambda i, p, nids, kids, ff, lf: (kids[p], nids[p])),
        ]
        operands = [x_p, w_p]
        if has_bias:
            in_specs.append(
                pl.BlockSpec((1, tn),
                             lambda i, p, nids, kids, ff, lf: (0, nids[p])))
            operands.append(b_p)

        # VMEM budget (double-buffered x/w/out + f32 acc); tiles are capped at
        # 512 so this stays well under v5e's 16 MiB / v7x's 32 MiB scoped
        # defaults.  Raise the limit only if the estimate demands it.
        in_item = jnp.dtype(cdtype).itemsize
        out_item = jnp.dtype(out_dtype).itemsize
        vmem_est = (2 * (tm * tk + tk * tn) * in_item
                    + 2 * tm * tn * out_item + tm * tn * 4)
        cp_kwargs = dict(dimension_semantics=("parallel", "arbitrary"))
        if vmem_est > 12 * 1024 * 1024:
            cp_kwargs["vmem_limit_bytes"] = min(int(vmem_est * 2), 48 * 1024 * 1024)

        # TODO(synk): when m_pad//tm == 1 on v7x, pair low/high n blocks so both
        # TensorCores get equal triangle area (megacore load balance).
        out_p = pl.pallas_call(
            kernel,
            out_shape=jax.ShapeDtypeStruct((m_pad, n_pad), out_dtype),
            grid_spec=pltpu.PrefetchScalarGridSpec(
                num_scalar_prefetch=4,
                grid=(m_pad // tm, num_pairs),
                in_specs=in_specs,
                out_specs=pl.BlockSpec(
                    (tm, tn), lambda i, p, nids, kids, ff, lf: (i, nids[p])),
                scratch_shapes=[pltpu.VMEM((tm, tn), jnp.float32)],
            ),
            compiler_params=pltpu.CompilerParams(**cp_kwargs),
        )(n_ids, k_ids, first_f, last_f, *operands)

    out = out_p[:B, :out_size]
    if len(orig_shape) == 1:
        out = out[0]
    elif len(orig_shape) > 2:
        out = out.reshape(orig_shape[:-1] + (out_size,))
    return out


# --------------------------------------------------------------------------
# Reference + tests
# --------------------------------------------------------------------------
def _reference(x, weight, bias):
    in_size, out_size = weight.shape
    row = jnp.arange(in_size)[:, None]
    col = jnp.arange(out_size)[None, :]
    w_masked = jnp.where(row > col, weight, jnp.zeros_like(weight))
    out = x @ w_masked
    if bias is not None:
        out = out + bias
    return out


if __name__ == "__main__":
    key = jax.random.PRNGKey(0)
    keys = jax.random.split(key, 8)

    # case 1: typical small square use (bias) -> single-tile fast path
    B, D_in, D_out = 8, 32, 32
    w1 = math.sqrt(2.0 / (D_in + D_out)) * jax.random.normal(
        keys[0], (D_in, D_out), jnp.float32)
    stdv = 1.0 / math.sqrt(D_out)
    b1 = jax.random.uniform(keys[1], (D_out,), minval=-stdv, maxval=stdv,
                            dtype=jnp.float32)
    x1 = jax.random.normal(keys[2], (B, D_in), jnp.float32)
    out1 = jax.block_until_ready(autoregressive_linear(x1, w1, b1))
    assert out1.shape == (B, D_out)
    assert jnp.allclose(out1, _reference(x1, w1, b1), atol=1e-5, rtol=1e-5), "case1"

    # case 2: ragged shapes, no bias -> padding + no-bias fast path
    B2, D_in2, D_out2 = 10, 48, 80
    w2 = math.sqrt(2.0 / (D_in2 + D_out2)) * jax.random.normal(
        keys[3], (D_in2, D_out2), jnp.float32)
    x2 = jax.random.normal(keys[4], (B2, D_in2), jnp.float32)
    out2 = jax.block_until_ready(autoregressive_linear(x2, w2, None))
    assert out2.shape == (B2, D_out2)
    assert jnp.allclose(out2, _reference(x2, w2, None), atol=1e-5, rtol=1e-5), "case2"

    # case 3: multi-tile general path (flattened non-zero (n,k) grid), bias
    B3, D3 = 16, 640
    w3 = math.sqrt(2.0 / (2 * D3)) * jax.random.normal(
        keys[5], (D3, D3), jnp.float32)
    stdv3 = 1.0 / math.sqrt(D3)
    b3 = jax.random.uniform(keys[6], (D3,), minval=-stdv3, maxval=stdv3,
                            dtype=jnp.float32)
    x3 = jax.random.normal(keys[7], (B3, D3), jnp.float32)
    out3 = jax.block_until_ready(autoregressive_linear(x3, w3, b3))
    assert out3.shape == (B3, D3)
    assert jnp.allclose(out3, _reference(x3, w3, b3), atol=5e-3, rtol=5e-3), "case3"

    # case 4: bf16 MXU operands (halved weight HBM traffic), looser tolerance
    out4 = jax.block_until_ready(
        autoregressive_linear(x1, w1, b1, compute_dtype=jnp.bfloat16))
    assert out4.shape == (B, D_out)
    assert jnp.allclose(out4, _reference(x1, w1, b1), atol=5e-2, rtol=5e-2), "case4"

    print("KERNEL_OK")
</pallas_src>

<mosaic_0001>
module attributes {stable_mosaic.version = 11 : i64} {
  func.func @kernel(%arg0: i32, %arg1: memref<8x128xf32, #tpu.memory_space<vmem>>, %arg2: memref<128x128xf32, #tpu.memory_space<vmem>>, %arg3: memref<1x128xf32, #tpu.memory_space<vmem>>, %arg4: memref<8x128xf32, #tpu.memory_space<vmem>>) attributes {dimension_semantics = [#tpu.dimension_semantics<parallel>], iteration_bounds = array<i64: 1>, scalar_prefetch = 0 : i64, scratch_operands = 0 : i64, tpu.core_type = #tpu.core_type<tc>, window_params = [{transform_indices = @transform_0, window_bounds = array<i64: 8, 128>}, {pipeline_mode = #tpu.pipeline_mode<synchronous>, transform_indices = @transform_1, window_bounds = array<i64: 128, 128>}, {pipeline_mode = #tpu.pipeline_mode<synchronous>, transform_indices = @transform_2, window_bounds = array<i64: 1, 128>}, {transform_indices = @transform_3, window_bounds = array<i64: 8, 128>}]} {
    %0 = tpu.iota {dimensions = array<i32: 0>} : vector<128x128xi32>
    %1 = tpu.iota {dimensions = array<i32: 1>} : vector<128x128xi32>
    %c0 = arith.constant 0 : index
    %c0_0 = arith.constant 0 : index
    %2 = vector.load %arg2[%c0, %c0_0] : memref<128x128xf32, #tpu.memory_space<vmem>>, vector<128x128xf32>
    %3 = arith.cmpi sgt, %0, %1 : vector<128x128xi32>
    %cst = arith.constant 0.000000e+00 : f32
    %4 = vector.broadcast %cst : f32 to vector<128x128xf32>
    %5 = arith.select %3, %2, %4 : vector<128x128xi1>, vector<128x128xf32>
    %c0_1 = arith.constant 0 : index
    %c0_2 = arith.constant 0 : index
    %6 = vector.load %arg1[%c0_1, %c0_2] : memref<8x128xf32, #tpu.memory_space<vmem>>, vector<8x128xf32>
    %cst_3 = arith.constant dense<0.000000e+00> : vector<8x128xf32>
    %7 = tpu.matmul %6, %5, %cst_3 {dimension_numbers = #tpu.dot_dimension_numbers<[1], [0], [0], [1], [0, 0, 1, 1], [], []>} : vector<8x128xf32>, vector<128x128xf32>, vector<8x128xf32> -> vector<8x128xf32>
    %c0_4 = arith.constant 0 : index
    %c0_5 = arith.constant 0 : index
    %8 = vector.load %arg3[%c0_4, %c0_5] : memref<1x128xf32, #tpu.memory_space<vmem>>, vector<1x128xf32>
    %9 = vector.broadcast %8 : vector<1x128xf32> to vector<8x128xf32>
    %10 = arith.addf %7, %9 : vector<8x128xf32>
    %c0_6 = arith.constant 0 : index
    %c0_7 = arith.constant 0 : index
    %11 = vector.load %arg4[%c0_6, %c0_7] : memref<8x128xf32, #tpu.memory_space<vmem>>, vector<8x128xf32>
    tpu.vector_store %arg4[%c0_6, %c0_7], %10 {strides = array<i32>} : memref<8x128xf32, #tpu.memory_space<vmem>>, vector<8x128xf32>,
    return
  }
  func.func @transform_0(%arg0: i32) -> (i32, i32) {
    %c0_i32 = arith.constant 0 : i32
    %c0_i32_0 = arith.constant 0 : i32
    return %arg0, %c0_i32 : i32, i32
  }
  func.func @transform_1(%arg0: i32) -> (i32, i32) {
    %c0_i32 = arith.constant 0 : i32
    %c0_i32_0 = arith.constant 0 : i32
    %c0_i32_1 = arith.constant 0 : i32
    return %c0_i32, %c0_i32_0 : i32, i32
  }
  func.func @transform_2(%arg0: i32) -> (i32, i32) {
    %c0_i32 = arith.constant 0 : i32
    %c0_i32_0 = arith.constant 0 : i32
    %c0_i32_1 = arith.constant 0 : i32
    return %c0_i32, %c0_i32_0 : i32, i32
  }
  func.func @transform_3(%arg0: i32) -> (i32, i32) {
    %c0_i32 = arith.constant 0 : i32
    %c0_i32_0 = arith.constant 0 : i32
    return %arg0, %c0_i32 : i32, i32
  }
}

</mosaic_0001>

<llo_original>
// kernel: tpu_custom_call.1
$region0: #{tpu_custom_call.1}
  #allocation0 [shape = 'u32[]', space=smem, size = 0x4, offset = 0x4, fixed_abs, tag = 'smem constant byte address 0x4 - core index']
  #allocation1 [shape = 'u32[144,128]{1,0:T(1,128)}', space=vmem, size = 0x12000, scoped, tag = 'internal scratch']
  %s0 = inlined_call_operand.hbm [shape: f32[8,128], index: 0, kind: input, shape index: {}]
  %s1 = inlined_call_operand.hbm [shape: f32[128,128], index: 1, kind: input, shape index: {}]
  %s2 = inlined_call_operand.vmem [shape: f32[1,128], index: 2, kind: input, shape index: {}]
  %s3 = inlined_call_operand.hbm [shape: f32[8,128], index: 3, kind: output, shape index: {}]
  %s4 = sld [smem:[#allocation0]]
  $region30: #{tpu_custom_call.1} parent=0
    _
  %s6 = ssub.s32 1, %s4
  %s7 = scalar_select 0, %s6, %s4
  $region1: #{tpu_custom_call.1} parent=0
    #allocation2 [shape = 'u8[4096]{0}', space=vmem, size = 0x1000, scoped, tag = 'input window, operand 0, single buffered']
    #allocation3 [shape = 's32[1]{0}', space=sflag, size = 0x4, scoped, tag = 'scoped memory for tpu_custom_call.1']
    #allocation4 [shape = 's32[1]{0}', space=sflag, size = 0x4, scoped, tag = 'scoped memory for tpu_custom_call.1']
    #allocation5 [shape = 'u8[65536]{0}', space=vmem, size = 0x10000, scoped, tag = 'input window, operand 1, single buffered']
    #allocation6 [shape = 's32[1]{0}', space=sflag, size = 0x4, scoped, tag = 'scoped memory for tpu_custom_call.1']
    #allocation7 [shape = 'u8[4096]{0}', space=vmem, size = 0x1000, scoped, tag = 'output window, operand 0, single buffered']
    %8 = vsyncpa [#allocation3], 0
    %9 = vsyncpa [#allocation6], 0
    %10 = vsyncpa [#allocation4], 0
    // Predicated region
    $region2: #{tpu_custom_call.1} parent=1 // pred_check
      _
    $region3: #{tpu_custom_call.1} parent=1 // pred_check_branch
      %12 = sbr.rel (0) target = $region5
    $region4: #{tpu_custom_call.1} parent=1 // pred_region
      %s14 = ssub.s32 128, 128
      %15 = vsyncadd [#allocation3], %s14
      %s17 = sshll.u32 [#allocation2], 4
      %s18 = int_to_ptr.vmem [resolvable:$true] %s17
      %20 = dma.hbm_to_vmem [thread:$0]  %s0, 128, %s18, [#allocation3]
    $region5: #{tpu_custom_call.1} parent=1 // pred_fallthru
      _
    // Predicated region
    $region6: #{tpu_custom_call.1} parent=1 // pred_check
      _
    $region7: #{tpu_custom_call.1} parent=1 // pred_check_branch
      %22 = sbr.rel (0) target = $region9
    $region8: #{tpu_custom_call.1} parent=1 // pred_region
      %s24 = ssub.s32 2048, 2048
      %25 = vsyncadd [#allocation6], %s24
      %s26 = sshll.u32 [#allocation5], 4
      %s27 = int_to_ptr.vmem [resolvable:$true] %s26
      %32 = dma.hbm_to_vmem [thread:$0]  %s1, 2048, %s27, [#allocation6], 128, 128, 8
    $region9: #{tpu_custom_call.1} parent=1 // pred_fallthru
      _
    // Predicated region
    $region10: #{tpu_custom_call.1} parent=1 // pred_check
      _
    $region11: #{tpu_custom_call.1} parent=1 // pred_check_branch
      %34 = sbr.rel (0) target = $region13
    $region12: #{tpu_custom_call.1} parent=1 // pred_region
      _
    $region13: #{tpu_custom_call.1} parent=1 // pred_fallthru
      _
    // Predicated region
    $region14: #{tpu_custom_call.1} parent=1 // pred_check
      _
    $region15: #{tpu_custom_call.1} parent=1 // pred_check_branch
      %36 = sbr.rel (0) target = $region17
    $region16: #{tpu_custom_call.1} parent=1 // pred_region
      %37 = dma.done [#allocation3], 128
    $region17: #{tpu_custom_call.1} parent=1 // pred_fallthru
      _
    // Predicated region
    $region18: #{tpu_custom_call.1} parent=1 // pred_check
      _
    $region19: #{tpu_custom_call.1} parent=1 // pred_check_branch
      %39 = sbr.rel (0) target = $region21
    $region20: #{tpu_custom_call.1} parent=1 // pred_region
      %40 = dma.done [#allocation6], 2048
    $region21: #{tpu_custom_call.1} parent=1 // pred_fallthru
      _
    %v41 = vlaneseq
    %v42 = vshrl.u32 %v41, 7
    %v43 = vadd.s32 %v42, 8
    %v44 = vadd.s32 %v42, 16
    %v45 = vadd.s32 %v42, 24
    %v46 = vadd.s32 %v42, 32
    %v47 = vadd.s32 %v42, 40
    %v48 = vadd.s32 %v42, 48
    %v49 = vadd.s32 %v42, 56
    %v50 = vadd.s32 %v42, 64
    %v51 = vadd.s32 %v42, 72
    %v52 = vadd.s32 %v42, 80
    %v53 = vadd.s32 %v42, 88
    %v54 = vadd.s32 %v42, 96
    %v55 = vadd.s32 %v42, 104
    %v56 = vadd.s32 %v42, 112
    %v57 = vadd.s32 %v42, 120
    %v58 = vlaneseq
    %v59 = vand.u32 %v58, 127
    %v60 = vld [vmem:[#allocation5] sm:$0xff]
    %v61 = vld [vmem:[#allocation5 + $0x8] sm:$0xff]
    %v62 = vld [vmem:[#allocation5 + $0x10] sm:$0xff]
    %v63 = vld [vmem:[#allocation5 + $0x18] sm:$0xff]
    %v64 = vld [vmem:[#allocation5 + $0x20] sm:$0xff]
    %v65 = vld [vmem:[#allocation5 + $0x28] sm:$0xff]
    %v66 = vld [vmem:[#allocation5 + $0x30] sm:$0xff]
    %v67 = vld [vmem:[#allocation5 + $0x38] sm:$0xff]
    %v68 = vld [vmem:[#allocation5 + $0x40] sm:$0xff]
    %v69 = vld [vmem:[#allocation5 + $0x48] sm:$0xff]
    %v70 = vld [vmem:[#allocation5 + $0x50] sm:$0xff]
    %v71 = vld [vmem:[#allocation5 + $0x58] sm:$0xff]
    %v72 = vld [vmem:[#allocation5 + $0x60] sm:$0xff]
    %v73 = vld [vmem:[#allocation5 + $0x68] sm:$0xff]
    %v74 = vld [vmem:[#allocation5 + $0x70] sm:$0xff]
    %v75 = vld [vmem:[#allocation5 + $0x78] sm:$0xff]
    %vm76 = vcmp.gt.s32.totalorder %v42, %v59
    %vm77 = vcmp.gt.s32.totalorder %v43, %v59
    %vm78 = vcmp.gt.s32.totalorder %v44, %v59
    %vm79 = vcmp.gt.s32.totalorder %v45, %v59
    %vm80 = vcmp.gt.s32.totalorder %v46, %v59
    %vm81 = vcmp.gt.s32.totalorder %v47, %v59
    %vm82 = vcmp.gt.s32.totalorder %v48, %v59
    %vm83 = vcmp.gt.s32.totalorder %v49, %v59
    %vm84 = vcmp.gt.s32.totalorder %v50, %v59
    %vm85 = vcmp.gt.s32.totalorder %v51, %v59
    %vm86 = vcmp.gt.s32.totalorder %v52, %v59
    %vm87 = vcmp.gt.s32.totalorder %v53, %v59
    %vm88 = vcmp.gt.s32.totalorder %v54, %v59
    %vm89 = vcmp.gt.s32.totalorder %v55, %v59
    %vm90 = vcmp.gt.s32.totalorder %v56, %v59
    %vm91 = vcmp.gt.s32.totalorder %v57, %v59
    %v92 = vsel %vm76, %v60, 0.0
    %v93 = vsel %vm77, %v61, 0.0
    %v94 = vsel %vm78, %v62, 0.0
    %v95 = vsel %vm79, %v63, 0.0
    %v96 = vsel %vm80, %v64, 0.0
    %v97 = vsel %vm81, %v65, 0.0
    %v98 = vsel %vm82, %v66, 0.0
    %v99 = vsel %vm83, %v67, 0.0
    %v100 = vsel %vm84, %v68, 0.0
    %v101 = vsel %vm85, %v69, 0.0
    %v102 = vsel %vm86, %v70, 0.0
    %v103 = vsel %vm87, %v71, 0.0
    %v104 = vsel %vm88, %v72, 0.0
    %v105 = vsel %vm89, %v73, 0.0
    %v106 = vsel %vm90, %v74, 0.0
    %v107 = vsel %vm91, %v75, 0.0
    %v108 = vld [vmem:[#allocation2] sm:$0xff]
    %v109 = vld [vmem:[%s2] sm:$0x1]
    %v111 = vlaneseq
    %v112 = vshrl.u32 %v111, 7
    %v113 = vsub.s32 0, %v112
    %v114 = vrot.slane %v109, %v113
    %116 = vmatprep.subr.mxu0 0.0
    %117 = vmatpush1.msra.mxu0 %v107
    %118 = vmatprep.subr.mxu0 0.0
    %119 = vmatpush1.msra.mxu0 %v106
    %120 = vmatprep.subr.mxu0 0.0
    %121 = vmatpush1.msra.mxu0 %v105
    %122 = vmatprep.subr.mxu0 0.0
    %123 = vmatpush1.msra.mxu0 %v104
    %124 = vmatprep.subr.mxu0 0.0
    %125 = vmatpush1.msra.mxu0 %v103
    %126 = vmatprep.subr.mxu0 0.0
    %127 = vmatpush1.msra.mxu0 %v102
    %128 = vmatprep.subr.mxu0 0.0
    %129 = vmatpush1.msra.mxu0 %v101
    %130 = vmatprep.subr.mxu0 0.0
    %131 = vmatpush1.msra.mxu0 %v100
    %132 = vmatprep.subr.mxu0 0.0
    %133 = vmatpush1.msra.mxu0 %v99
    %134 = vmatprep.subr.mxu0 0.0
    %135 = vmatpush1.msra.mxu0 %v98
    %136 = vmatprep.subr.mxu0 0.0
    %137 = vmatpush1.msra.mxu0 %v97
    %138 = vmatprep.subr.mxu0 0.0
    %139 = vmatpush1.msra.mxu0 %v96
    %140 = vmatprep.subr.mxu0 0.0
    %141 = vmatpush1.msra.mxu0 %v95
    %142 = vmatprep.subr.mxu0 0.0
    %143 = vmatpush1.msra.mxu0 %v94
    %144 = vmatprep.subr.mxu0 0.0
    %145 = vmatpush1.msra.mxu0 %v93
    %146 = vmatprep.subr.mxu0 0.0
    %147 = vmatpush1.msra.mxu0 %v92
    %148 = vmatprep.subr.mxu0 0.0
    %149 = vmatpush2.msra.mxu0 0.0
    %150 = vmatprep.subr.mxu0 0.0
    %151 = vmatpush2.msra.mxu0 0.0
    %152 = vmatprep.subr.mxu0 0.0
    %153 = vmatpush2.msra.mxu0 0.0
    %154 = vmatprep.subr.mxu0 0.0
    %155 = vmatpush2.msra.mxu0 0.0
    %156 = vmatprep.subr.mxu0 0.0
    %157 = vmatpush2.msra.mxu0 0.0
    %158 = vmatprep.subr.mxu0 0.0
    %159 = vmatpush2.msra.mxu0 0.0
    %160 = vmatprep.subr.mxu0 0.0
    %161 = vmatpush2.msra.mxu0 0.0
    %162 = vmatprep.subr.mxu0 0.0
    %163 = vmatpush2.msra.mxu0 0.0
    %164 = vmatprep.subr.mxu0 0.0
    %165 = vmatpush2.msra.mxu0 0.0
    %166 = vmatprep.subr.mxu0 0.0
    %167 = vmatpush2.msra.mxu0 0.0
    %168 = vmatprep.subr.mxu0 0.0
    %169 = vmatpush2.msra.mxu0 0.0
    %170 = vmatprep.subr.mxu0 0.0
    %171 = vmatpush2.msra.mxu0 0.0
    %172 = vmatprep.subr.mxu0 0.0
    %173 = vmatpush2.msra.mxu0 0.0
    %174 = vmatprep.subr.mxu0 0.0
    %175 = vmatpush2.msra.mxu0 0.0
    %176 = vmatprep.subr.mxu0 0.0
    %177 = vmatpush2.msra.mxu0 0.0
    %178 = vmatprep.subr.mxu0 0.0
    %179 = vmatpush2.msra.mxu0 0.0
    %180 = vmatprep.mubr.f32.mxu0 0.0
    %181 = vmatmul.mubr.f32.gmra.mxu0 %v108
    %v182 = vpop.f32.mrf.mxu0
    %v183 = vadd.f32 %v114, %v182
    %v184 = vpop.f32.mrf.mxu0
    %185 = vdwg.mxu0
    %186 = vst [vmem:[#allocation7] sm:$0xff] %v183
    // Predicated region
    $region22: #{tpu_custom_call.1} parent=1 // pred_check
      _
    $region23: #{tpu_custom_call.1} parent=1 // pred_check_branch
      %188 = sbr.rel (0) target = $region25
    $region24: #{tpu_custom_call.1} parent=1 // pred_region
      %s190 = ssub.s32 128, 128
      %191 = vsyncadd [#allocation4], %s190
      %s193 = sshll.u32 [#allocation7], 4
      %s194 = int_to_ptr.vmem [resolvable:$true] %s193
      %196 = dma.vmem_to_hbm [thread:$0]  %s194, 128, %s3, [#allocation4]
    $region25: #{tpu_custom_call.1} parent=1 // pred_fallthru
      _
    // Predicated region
    $region26: #{tpu_custom_call.1} parent=1 // pred_check
      _
    $region27: #{tpu_custom_call.1} parent=1 // pred_check_branch
      %198 = sbr.rel (0) target = $region29
    $region28: #{tpu_custom_call.1} parent=1 // pred_region
      %199 = dma.done [#allocation4], 128
    $region29: #{tpu_custom_call.1} parent=1 // pred_fallthru
      _
    %200 = vsyncpa [#allocation3], 1
    %201 = vsyncpa [#allocation6], 1
    %202 = vsyncpa [#allocation4], 1

</llo_original>
